<compile_context>
chip_gen: v7x
topology: tpu7x:2x2x1
jax: 0.10.0
libtpu: 0.0.40
codegen_flags: <defaults>
</compile_context>

<pallas_src>
import functools

import jax
import jax.numpy as jnp
from jax import lax
from jax.experimental import pallas as pl
from jax.experimental.pallas import tpu as pltpu

BN_EPS = 1e-5                      # PyTorch BatchNorm2d default eps
LANE = 128                         # TPU lane width
_VMEM_BUDGET = 40 * 1024 * 1024    # per-grid-step working-set target (fits v7x 64 MiB VMEM)
_VMEM_LIMIT = 48 * 1024 * 1024     # scoped VMEM limit handed to Mosaic


def _round_up(x, m):
    return ((x + m - 1) // m) * m


def _phase_vmem_bytes(ts, K, Cp, Cout):
    """Rough per-grid-step VMEM bytes for the larger (phase-2) kernel, assuming
    default double-buffering of every blocked operand plus f32 temporaries."""
    patches = 2 * K * ts * 2        # bf16 patches tile, double-buffered
    weight = 2 * Cp * K * 2         # bf16 weight (constant block, 2 pipeline buffers)
    scale_shift = 2 * 2 * Cp * 4    # f32 scale + shift
    out = 2 * Cout * ts * 4         # f32 output tile, double-buffered
    temps = 2 * Cp * ts * 4         # f32 conv value + BN/ReLU temporary
    return patches + weight + scale_shift + out + temps


# ---------------------------------------------------------------------------
# Phase 1: conv tile on the MXU (bf16 operands, f32 accumulation) ->
#          per-tile per-channel partial BN statistics only (no conv stored).
# ---------------------------------------------------------------------------
def _conv_stats_kernel(p_ref, w_ref, psum_ref, psumsq_ref):
    # p_ref:      [1, K, TS]    bf16  channel-major im2col columns for this tile
    # w_ref:      [Cp, K]       bf16  conv weight (output channels padded to Cp)
    # psum_ref:   [1, 1, Cp, 1] f32   per-tile per-channel sum
    # psumsq_ref: [1, 1, Cp, 1] f32   per-tile per-channel sum of squares
    conv = jnp.dot(w_ref[...], p_ref[0],
                   preferred_element_type=jnp.float32)          # [Cp, TS] f32
    psum_ref[...] = jnp.sum(conv, axis=1, keepdims=True)[None, None]
    psumsq_ref[...] = jnp.sum(conv * conv, axis=1, keepdims=True)[None, None]


# ---------------------------------------------------------------------------
# Phase 2: recompute the conv tile, apply folded BN (one FMA) + ReLU, and write
#          the tile directly in channel-major (NCHW) layout, real channels only.
# ---------------------------------------------------------------------------
def _conv_bn_relu_kernel(p_ref, w_ref, scale_ref, shift_ref, out_ref, *, cout):
    # p_ref: [1, K, TS] bf16 ; w_ref: [Cp, K] bf16 ; scale/shift: [Cp, 1] f32
    # out_ref: [1, Cout, TS] f32  (TS is the lane-dense minor dim -> unmasked vst)
    conv = jnp.dot(w_ref[...], p_ref[0],
                   preferred_element_type=jnp.float32)          # [Cp, TS] f32
    y = jnp.maximum(conv * scale_ref[...] + shift_ref[...], 0.0)
    out_ref[...] = y[:cout, :][None]                            # drop padded channels


@functools.partial(jax.jit,
                   static_argnames=("stride", "padding", "dilation", "tile_cols"))
def conv2d_batchnorm_relu(x, weight, bias, gamma, beta, *,
                          stride=1, padding=1, dilation=1, tile_cols=1024):
    """x: [N, Cin, H, W] f32 (NCHW), weight: [Cout, Cin, kh, kw] f32 (OIHW).

    Conv2d + BatchNorm2d (training-mode batch statistics) + ReLU.
    `bias` is accepted for API parity with the PyTorch module but is cancelled
    exactly by the BN mean subtraction, so it is unused.
    """
    # TODO(synk): if this kernel is ever reused for the is_batchnorm=False path,
    #             the conv bias must be re-added (it is only dead work under BN).
    del bias
    N, Cin, H, W = x.shape
    Cout, _, kh, kw = weight.shape

    Ho = (H + 2 * padding - dilation * (kh - 1) - 1) // stride + 1
    Wo = (W + 2 * padding - dilation * (kw - 1) - 1) // stride + 1
    HW = Ho * Wo
    K = Cin * kh * kw
    Cp = _round_up(Cout, LANE)   # 128-lane channels; 256-alignment only pays off
                                 # once the conv is FLOP-bound (v6e/v7x MXU is 2x256x256).

    # ---- spatial tile selection (multiple of 128, VMEM-budgeted, >=2 grid tiles) ----
    ts = max(LANE, min(_round_up(tile_cols, LANE), _round_up(HW, LANE)))
    while ts > LANE and _phase_vmem_bytes(ts, K, Cp, Cout) > _VMEM_BUDGET:
        ts -= LANE
    # TODO(synk): for very large K (= Cin*kh*kw) add a trailing "arbitrary" K grid axis
    #             with an f32 VMEM accumulator instead of holding full (Cp,K)/(K,ts) blocks.
    if N * (-(-HW // ts)) < 2 and ts > LANE:   # keep both v7x TensorCores busy
        ts = max(LANE, _round_up(ts // 2, LANE))
    Sp = _round_up(HW, ts)        # padded spatial extent (zero columns, masked in stats
                                  # by construction: zero patches -> zero conv -> zero sums)
    n_s = Sp // ts

    # ---- XLA glue: channel-major im2col in bf16 -> patches [N, K, Sp] ----
    # TODO(synk): replace with an in-kernel implicit-GEMM im2col (halo'd input slab +
    #             kh*kw shifted matmuls) for large-Cin shapes, where the kh*kw HBM
    #             inflation of this array becomes the dominant traffic term.
    xb = x.astype(jnp.bfloat16)
    xp = jnp.pad(xb, ((0, 0), (0, 0), (padding, padding), (padding, padding)))
    cols = []
    for i in range(kh):
        for j in range(kw):
            di, dj = i * dilation, j * dilation
            cols.append(xp[:, :,
                           di: di + (Ho - 1) * stride + 1: stride,
                           dj: dj + (Wo - 1) * stride + 1: stride])
    patches = jnp.stack(cols, axis=2)            # [N, Cin, kh*kw, Ho, Wo]
    patches = patches.reshape(N, K, HW)          # [N, K, HW]  (K order matches weight)
    if Sp != HW:
        patches = jnp.pad(patches, ((0, 0), (0, 0), (0, Sp - HW)))

    # weight as [Cp, K] bf16 (zero-padded output channels)
    w2 = weight.reshape(Cout, K).astype(jnp.bfloat16)
    w2 = jnp.pad(w2, ((0, Cp - Cout), (0, 0)))

    cparams = pltpu.CompilerParams(
        dimension_semantics=("parallel", "parallel"),
        vmem_limit_bytes=_VMEM_LIMIT)

    # ---- phase 1: MXU conv + on-chip partial BN statistics (tiny outputs only) ----
    psum, psumsq = pl.pallas_call(
        _conv_stats_kernel,
        out_shape=(
            jax.ShapeDtypeStruct((N, n_s, Cp, 1), jnp.float32),
            jax.ShapeDtypeStruct((N, n_s, Cp, 1), jnp.float32),
        ),
        grid=(N, n_s),
        in_specs=[
            pl.BlockSpec((1, K, ts), lambda n, s: (n, 0, s)),
            pl.BlockSpec((Cp, K), lambda n, s: (0, 0)),
        ],
        out_specs=(
            pl.BlockSpec((1, 1, Cp, 1), lambda n, s: (n, s, 0, 0)),
            pl.BlockSpec((1, 1, Cp, 1), lambda n, s: (n, s, 0, 0)),
        ),
        compiler_params=cparams,
    )(patches, w2)

    # ---- tiny per-channel finalize: fold BN into one scale / shift ----
    # (padded spatial columns and padded channels contribute exactly zero)
    count = jnp.float32(N * HW)
    sums = jnp.sum(psum, axis=(0, 1, 3))                      # [Cp]
    sumsqs = jnp.sum(psumsq, axis=(0, 1, 3))                  # [Cp]
    mean = sums / count
    var = jnp.maximum(sumsqs / count - mean * mean, 0.0)      # biased (training) variance
    # TODO(synk): E[x^2]-mean^2 in f32 can cancel catastrophically at training scale;
    #             switch to a compensated / centered accumulation if M gets very large.
    # TODO(synk): running_mean / running_var buffer updates (module state) are not
    #             produced; `mean` / `var` here are the batch stats if state parity is needed.
    inv_std = lax.rsqrt(var + BN_EPS)
    gamma_p = jnp.concatenate(
        [gamma.astype(jnp.float32), jnp.ones((Cp - Cout,), jnp.float32)])
    beta_p = jnp.concatenate(
        [beta.astype(jnp.float32), jnp.zeros((Cp - Cout,), jnp.float32)])
    scale = (gamma_p * inv_std).reshape(Cp, 1)
    shift = (beta_p - mean * gamma_p * inv_std).reshape(Cp, 1)

    # ---- phase 2: recompute conv + folded BN + ReLU, write NCHW directly ----
    out_cm = pl.pallas_call(
        functools.partial(_conv_bn_relu_kernel, cout=Cout),
        out_shape=jax.ShapeDtypeStruct((N, Cout, Sp), jnp.float32),
        grid=(N, n_s),
        in_specs=[
            pl.BlockSpec((1, K, ts), lambda n, s: (n, 0, s)),
            pl.BlockSpec((Cp, K), lambda n, s: (0, 0)),
            pl.BlockSpec((Cp, 1), lambda n, s: (0, 0)),
            pl.BlockSpec((Cp, 1), lambda n, s: (0, 0)),
        ],
        out_specs=pl.BlockSpec((1, Cout, ts), lambda n, s: (n, 0, s)),
        compiler_params=cparams,
    )(patches, w2, scale, shift)

    # drop spatial padding (no-op when HW % ts == 0) and restore [N, Cout, Ho, Wo]
    if Sp != HW:
        out_cm = out_cm[:, :, :HW]
    return out_cm.reshape(N, Cout, Ho, Wo)


def _reference(x, weight, bias, gamma, beta, *, stride=1, padding=1, dilation=1):
    """Pure-JAX reference matching PyTorch Conv2d + BatchNorm2d(train) + ReLU."""
    conv = lax.conv_general_dilated(
        x, weight,
        window_strides=(stride, stride),
        padding=((padding, padding), (padding, padding)),
        rhs_dilation=(dilation, dilation),
        dimension_numbers=("NCHW", "OIHW", "NCHW"),
    ) + bias[None, :, None, None]
    mean = jnp.mean(conv, axis=(0, 2, 3), keepdims=True)
    var = jnp.mean((conv - mean) ** 2, axis=(0, 2, 3), keepdims=True)
    y = (conv - mean) * lax.rsqrt(var + BN_EPS)
    y = y * gamma[None, :, None, None] + beta[None, :, None, None]
    return jnp.maximum(y, 0.0)


if __name__ == "__main__":
    # conv2DBatchNormRelu(in_channels=4, n_filters=8, k_size=3, stride=1,
    #                     padding=1, bias=True, is_batchnorm=True, is_activation=True)
    N, Cin, H, W = 2, 4, 16, 16
    Cout, k = 8, 3

    key = jax.random.PRNGKey(0)
    kx, kw_, kb, kg, kbeta = jax.random.split(key, 5)

    x = jax.random.normal(kx, (N, Cin, H, W), dtype=jnp.float32)
    weight = jax.random.normal(kw_, (Cout, Cin, k, k), dtype=jnp.float32) * 0.1
    bias = jax.random.normal(kb, (Cout,), dtype=jnp.float32) * 0.1
    gamma = 1.0 + 0.1 * jax.random.normal(kg, (Cout,), dtype=jnp.float32)
    beta = 0.1 * jax.random.normal(kbeta, (Cout,), dtype=jnp.float32)

    # tile_cols=128 -> a (2, 2) grid at this small shape, exercising the cross-tile
    # statistics reduction; realistic shapes use the default 1024-wide tiles.
    out = conv2d_batchnorm_relu(x, weight, bias, gamma, beta,
                                stride=1, padding=1, dilation=1, tile_cols=128)
    out = jax.block_until_ready(out)
    assert out.shape == (N, Cout, H, W), out.shape

    # tight check: reference fed the same bf16-rounded matmul operands
    ref_bf16 = _reference(
        x.astype(jnp.bfloat16).astype(jnp.float32),
        weight.astype(jnp.bfloat16).astype(jnp.float32),
        bias, gamma, beta, stride=1, padding=1, dilation=1)
    assert bool(jnp.allclose(out, ref_bf16, atol=3e-3, rtol=3e-3)), \
        "mismatch vs bf16-operand reference"

    # loose check: full-f32 reference (bf16 MXU operands are a deliberate
    # performance choice; expected deviation ~1e-2)
    ref_f32 = _reference(x, weight, bias, gamma, beta,
                         stride=1, padding=1, dilation=1)
    assert bool(jnp.allclose(out, ref_f32, atol=5e-2, rtol=5e-2)), \
        "mismatch vs f32 reference"

    print("KERNEL_OK")
</pallas_src>

<mosaic_0001>
module attributes {stable_mosaic.version = 11 : i64} {
  func.func @_conv_stats_kernel(%arg0: i32, %arg1: i32, %arg2: memref<1x36x128xbf16, #tpu.memory_space<vmem>>, %arg3: memref<128x36xbf16, #tpu.memory_space<vmem>>, %arg4: memref<1x1x128x1xf32, #tpu.memory_space<vmem>>, %arg5: memref<1x1x128x1xf32, #tpu.memory_space<vmem>>) attributes {dimension_semantics = [#tpu.dimension_semantics<parallel>, #tpu.dimension_semantics<parallel>], iteration_bounds = array<i64: 2, 2>, scalar_prefetch = 0 : i64, scratch_operands = 0 : i64, tpu.core_type = #tpu.core_type<tc>, window_params = [{transform_indices = @transform_0, window_bounds = array<i64: 1, 36, 128>}, {pipeline_mode = #tpu.pipeline_mode<synchronous>, transform_indices = @transform_1, window_bounds = array<i64: 128, 36>}, {transform_indices = @transform_2, window_bounds = array<i64: 1, 1, 128, 1>}, {transform_indices = @transform_3, window_bounds = array<i64: 1, 1, 128, 1>}]} {
    %c0 = arith.constant 0 : index
    %c0_0 = arith.constant 0 : index
    %0 = vector.load %arg3[%c0, %c0_0] : memref<128x36xbf16, #tpu.memory_space<vmem>>, vector<128x36xbf16>
    %c0_1 = arith.constant 0 : index
    %c0_2 = arith.constant 0 : index
    %c0_3 = arith.constant 0 : index
    %1 = vector.load %arg2[%c0_1, %c0_2, %c0_3] : memref<1x36x128xbf16, #tpu.memory_space<vmem>>, vector<1x36x128xbf16>
    %2 = vector.shape_cast %1 : vector<1x36x128xbf16> to vector<36x128xbf16>
    %cst = arith.constant dense<0.000000e+00> : vector<128x128xf32>
    %3 = tpu.matmul %0, %2, %cst {dimension_numbers = #tpu.dot_dimension_numbers<[1], [0], [0], [1], [0, 0, 1, 1], [], []>} : vector<128x36xbf16>, vector<36x128xbf16>, vector<128x128xf32> -> vector<128x128xf32>
    %cst_4 = arith.constant dense<0.000000e+00> : vector<128xf32>
    %4 = vector.multi_reduction <add>, %3, %cst_4 [1] : vector<128x128xf32> to vector<128xf32>
    %5 = vector.shape_cast %4 : vector<128xf32> to vector<128x1xf32>
    %6 = vector.shape_cast %5 : vector<128x1xf32> to vector<1x1x128x1xf32>
    %c0_5 = arith.constant 0 : index
    %c0_6 = arith.constant 0 : index
    %c0_7 = arith.constant 0 : index
    %c0_8 = arith.constant 0 : index
    %7 = vector.load %arg4[%c0_5, %c0_6, %c0_7, %c0_8] : memref<1x1x128x1xf32, #tpu.memory_space<vmem>>, vector<1x1x128x1xf32>
    tpu.vector_store %arg4[%c0_5, %c0_6, %c0_7, %c0_8], %6 {strides = array<i32>} : memref<1x1x128x1xf32, #tpu.memory_space<vmem>>, vector<1x1x128x1xf32>,
    %8 = arith.mulf %3, %3 : vector<128x128xf32>
    %cst_9 = arith.constant dense<0.000000e+00> : vector<128xf32>
    %9 = vector.multi_reduction <add>, %8, %cst_9 [1] : vector<128x128xf32> to vector<128xf32>
    %10 = vector.shape_cast %9 : vector<128xf32> to vector<128x1xf32>
    %11 = vector.shape_cast %10 : vector<128x1xf32> to vector<1x1x128x1xf32>
    %c0_10 = arith.constant 0 : index
    %c0_11 = arith.constant 0 : index
    %c0_12 = arith.constant 0 : index
    %c0_13 = arith.constant 0 : index
    %12 = vector.load %arg5[%c0_10, %c0_11, %c0_12, %c0_13] : memref<1x1x128x1xf32, #tpu.memory_space<vmem>>, vector<1x1x128x1xf32>
    tpu.vector_store %arg5[%c0_10, %c0_11, %c0_12, %c0_13], %11 {strides = array<i32>} : memref<1x1x128x1xf32, #tpu.memory_space<vmem>>, vector<1x1x128x1xf32>,
    return
  }
  func.func @transform_0(%arg0: i32, %arg1: i32) -> (i32, i32, i32) {
    %c0_i32 = arith.constant 0 : i32
    %c0_i32_0 = arith.constant 0 : i32
    return %arg0, %c0_i32, %arg1 : i32, i32, i32
  }
  func.func @transform_1(%arg0: i32, %arg1: i32) -> (i32, i32) {
    %c0_i32 = arith.constant 0 : i32
    %c0_i32_0 = arith.constant 0 : i32
    %c0_i32_1 = arith.constant 0 : i32
    return %c0_i32, %c0_i32_0 : i32, i32
  }
  func.func @transform_2(%arg0: i32, %arg1: i32) -> (i32, i32, i32, i32) {
    %c0_i32 = arith.constant 0 : i32
    %c0_i32_0 = arith.constant 0 : i32
    %c0_i32_1 = arith.constant 0 : i32
    return %arg0, %arg1, %c0_i32, %c0_i32_0 : i32, i32, i32, i32
  }
  func.func @transform_3(%arg0: i32, %arg1: i32) -> (i32, i32, i32, i32) {
    %c0_i32 = arith.constant 0 : i32
    %c0_i32_0 = arith.constant 0 : i32
    %c0_i32_1 = arith.constant 0 : i32
    return %arg0, %arg1, %c0_i32, %c0_i32_0 : i32, i32, i32, i32
  }
}

module attributes {stable_mosaic.version = 11 : i64} {
  func.func @_conv_bn_relu_kernel(%arg0: i32, %arg1: i32, %arg2: memref<1x36x128xbf16, #tpu.memory_space<vmem>>, %arg3: memref<128x36xbf16, #tpu.memory_space<vmem>>, %arg4: memref<128x1xf32, #tpu.memory_space<vmem>>, %arg5: memref<128x1xf32, #tpu.memory_space<vmem>>, %arg6: memref<1x8x128xf32, #tpu.memory_space<vmem>>) attributes {dimension_semantics = [#tpu.dimension_semantics<parallel>, #tpu.dimension_semantics<parallel>], iteration_bounds = array<i64: 2, 2>, scalar_prefetch = 0 : i64, scratch_operands = 0 : i64, tpu.core_type = #tpu.core_type<tc>, window_params = [{transform_indices = @transform_0, window_bounds = array<i64: 1, 36, 128>}, {pipeline_mode = #tpu.pipeline_mode<synchronous>, transform_indices = @transform_1, window_bounds = array<i64: 128, 36>}, {pipeline_mode = #tpu.pipeline_mode<synchronous>, transform_indices = @transform_2, window_bounds = array<i64: 128, 1>}, {pipeline_mode = #tpu.pipeline_mode<synchronous>, transform_indices = @transform_3, window_bounds = array<i64: 128, 1>}, {transform_indices = @transform_4, window_bounds = array<i64: 1, 8, 128>}]} {
    %c0 = arith.constant 0 : index
    %c0_0 = arith.constant 0 : index
    %0 = vector.load %arg3[%c0, %c0_0] : memref<128x36xbf16, #tpu.memory_space<vmem>>, vector<128x36xbf16>
    %c0_1 = arith.constant 0 : index
    %c0_2 = arith.constant 0 : index
    %c0_3 = arith.constant 0 : index
    %1 = vector.load %arg2[%c0_1, %c0_2, %c0_3] : memref<1x36x128xbf16, #tpu.memory_space<vmem>>, vector<1x36x128xbf16>
    %2 = vector.shape_cast %1 : vector<1x36x128xbf16> to vector<36x128xbf16>
    %cst = arith.constant dense<0.000000e+00> : vector<128x128xf32>
    %3 = tpu.matmul %0, %2, %cst {dimension_numbers = #tpu.dot_dimension_numbers<[1], [0], [0], [1], [0, 0, 1, 1], [], []>} : vector<128x36xbf16>, vector<36x128xbf16>, vector<128x128xf32> -> vector<128x128xf32>
    %c0_4 = arith.constant 0 : index
    %c0_5 = arith.constant 0 : index
    %4 = vector.load %arg4[%c0_4, %c0_5] : memref<128x1xf32, #tpu.memory_space<vmem>>, vector<128x1xf32>
    %5 = vector.broadcast %4 : vector<128x1xf32> to vector<128x128xf32>
    %6 = arith.mulf %3, %5 : vector<128x128xf32>
    %c0_6 = arith.constant 0 : index
    %c0_7 = arith.constant 0 : index
    %7 = vector.load %arg5[%c0_6, %c0_7] : memref<128x1xf32, #tpu.memory_space<vmem>>, vector<128x1xf32>
    %8 = vector.broadcast %7 : vector<128x1xf32> to vector<128x128xf32>
    %9 = arith.addf %6, %8 : vector<128x128xf32>
    %cst_8 = arith.constant 0.000000e+00 : f32
    %10 = vector.broadcast %cst_8 : f32 to vector<128x128xf32>
    %11 = arith.maximumf %9, %10 : vector<128x128xf32>
    %12 = vector.extract_strided_slice %11 {offsets = [0, 0], sizes = [8, 128], strides = [1, 1]} : vector<128x128xf32> to vector<8x128xf32>
    %13 = vector.shape_cast %12 : vector<8x128xf32> to vector<1x8x128xf32>
    %c0_9 = arith.constant 0 : index
    %c0_10 = arith.constant 0 : index
    %c0_11 = arith.constant 0 : index
    %14 = vector.load %arg6[%c0_9, %c0_10, %c0_11] : memref<1x8x128xf32, #tpu.memory_space<vmem>>, vector<1x8x128xf32>
    tpu.vector_store %arg6[%c0_9, %c0_10, %c0_11], %13 {strides = array<i32>} : memref<1x8x128xf32, #tpu.memory_space<vmem>>, vector<1x8x128xf32>,
    return
  }
  func.func @transform_0(%arg0: i32, %arg1: i32) -> (i32, i32, i32) {
    %c0_i32 = arith.constant 0 : i32
    %c0_i32_0 = arith.constant 0 : i32
    return %arg0, %c0_i32, %arg1 : i32, i32, i32
  }
  func.func @transform_1(%arg0: i32, %arg1: i32) -> (i32, i32) {
    %c0_i32 = arith.constant 0 : i32
    %c0_i32_0 = arith.constant 0 : i32
    %c0_i32_1 = arith.constant 0 : i32
    return %c0_i32, %c0_i32_0 : i32, i32
  }
  func.func @transform_2(%arg0: i32, %arg1: i32) -> (i32, i32) {
    %c0_i32 = arith.constant 0 : i32
    %c0_i32_0 = arith.constant 0 : i32
    %c0_i32_1 = arith.constant 0 : i32
    return %c0_i32, %c0_i32_0 : i32, i32
  }
  func.func @transform_3(%arg0: i32, %arg1: i32) -> (i32, i32) {
    %c0_i32 = arith.constant 0 : i32
    %c0_i32_0 = arith.constant 0 : i32
    %c0_i32_1 = arith.constant 0 : i32
    return %c0_i32, %c0_i32_0 : i32, i32
  }
  func.func @transform_4(%arg0: i32, %arg1: i32) -> (i32, i32, i32) {
    %c0_i32 = arith.constant 0 : i32
    %c0_i32_0 = arith.constant 0 : i32
    return %arg0, %c0_i32, %arg1 : i32, i32, i32
  }
}

</mosaic_0001>

<llo_original>
// kernel: conv2d_batchnorm_relu.2
$region0: #{conv2d_batchnorm_relu.2}
  #allocation0 [shape = 'u32[]', space=smem, size = 0x4, offset = 0x4, fixed_abs, tag = 'smem constant byte address 0x4 - core index']
  #allocation1 [shape = 'u32[144,128]{1,0:T(1,128)}', space=vmem, size = 0x12000, scoped, tag = 'internal scratch']
  %s0 = inlined_call_operand.vmem [shape: bf16[2,36,256], index: 0, kind: input, shape index: {}]
  %s1 = inlined_call_operand.vmem [shape: bf16[128,36], index: 1, kind: input, shape index: {}]
  %s2 = inlined_call_operand.vmem [shape: f32[2,2,128,1], index: 2, kind: output, shape index: {0}]
  %s3 = inlined_call_operand.vmem [shape: f32[2,2,128,1], index: 3, kind: output, shape index: {1}]
  %4 = xla_tuple %s2, %s3
  %s5 = sld [smem:[#allocation0]]
  $region90: #{conv2d_batchnorm_relu.2} parent=0
    _
  %s7 = ssub.s32 1, %s5
  %s8 = scalar_select 0, %s7, %s5
  $region1: #{conv2d_batchnorm_relu.2} parent=0
    #allocation2 [shape = 'u8[20480]{0}', space=vmem, size = 0x5000, scoped, tag = 'input window, operand 0']
    loop: start=0, step=1, limit=6
    $region2: #{conv2d_batchnorm_relu.2} parent=1 // loop_pre_header
      _
    $region3: #{conv2d_batchnorm_relu.2} parent=1 // loop_header
      %s10 = sphi 0, %s14
      %p11 = scmp.ge.s32.totalorder %s10, 6
      %s17 = sphi 0, %s29
      %s18 = sphi 0, %s25
      %s19 = sphi 0, %s17
      %s20 = sphi 0, %s18
      %s21 = sphi 0, %s19
      %s22 = sphi 0, %s20
      %s34 = sphi 0, %s36
      %s37 = sphi 0, %s34
      %s38 = sphi 0, %s37
      %s54 = sphi 0, %s38
      %s58 = sphi 0, %s58
      %s60 = sphi 0, %s58
      %s61 = sphi 0, %s60
      %s75 = sphi 0, %s61
      %s83 = sphi 0, %s85
      %s86 = sphi 0, %s83
      %s87 = sphi 0, %s86
      %s103 = sphi 0, %s87
      %s111 = sphi 0, %s113
      %s114 = sphi 0, %s111
      %s115 = sphi 0, %s114
      %s131 = sphi 0, %s115
    $region4: #{conv2d_batchnorm_relu.2} parent=1 // loop_header_branch
      %13 = sbr.rel (%p11) target = $region8
    $region5: #{conv2d_batchnorm_relu.2} parent=1 // loop_body
      %s15 = ssub.s32 %s10, 1
      %s16 = ssub.s32 %s10, 2
      %s23 = sadd.s32 1, %s18
      %p24 = scmp.ge.s32.totalorder %s23, 2
      %s25 = scalar_select %p24, 0, %s23
      %s26 = sadd.s32 1, %s17
      %s27 = scalar_select %p24, %s26, %s17
      %p28 = scmp.ge.s32.totalorder %s27, 2
      %s29 = scalar_select %p28, 0, %s27
      %s30 = ssub.s32 %s17, %s29
      %s31 = ssub.s32 %s18, %s25
      %s32 = sor.u32 %s30, %s31
      %p33 = scmp.eq.s32.totalorder %s32, 0
      %s35 = sadd.s32 %s34, 1
      %s36 = scalar_select %p33, %s34, %s35
      %p39 = pneg %p33
      %p40 = scmp.eq.s32.totalorder %s10, 3
      %p41 = por %p39, %p40
      %p42 = scmp.ne.s32.totalorder %s34, %s37
      %p43 = scmp.eq.s32.totalorder %s10, 0
      %p44 = por %p42, %p43
      %p45 = scmp.ne.s32.totalorder %s34, %s37
      %p46 = scmp.eq.s32.totalorder %s15, 3
      %p47 = por %p45, %p46
      %p48 = scmp.ne.s32.totalorder %s37, %s38
      %p49 = scmp.eq.s32.totalorder %s15, 0
      %p50 = por %p48, %p49
      %p51 = scmp.ne.s32.totalorder %s37, %s38
      %p52 = scmp.eq.s32.totalorder %s16, 3
      %p53 = por %p51, %p52
      %p55 = scmp.ne.s32.totalorder %s38, %s54
      %p56 = scmp.eq.s32.totalorder %s16, 0
      %p57 = por %p55, %p56
      %s59 = sadd.s32 %s58, 1
      %p62 = scmp.eq.s32.totalorder %s10, 3
      %p63 = scmp.ne.s32.totalorder %s58, %s60
      %p64 = scmp.eq.s32.totalorder %s10, 0
      %p65 = por %p63, %p64
      %p66 = scmp.ne.s32.totalorder %s58, %s60
      %p67 = scmp.eq.s32.totalorder %s15, 3
      %p68 = por %p66, %p67
      %p69 = scmp.ne.s32.totalorder %s60, %s61
      %p70 = scmp.eq.s32.totalorder %s15, 0
      %p71 = por %p69, %p70
      %p72 = scmp.ne.s32.totalorder %s60, %s61
      %p73 = scmp.eq.s32.totalorder %s16, 3
      %p74 = por %p72, %p73
      %p76 = scmp.ne.s32.totalorder %s61, %s75
      %p77 = scmp.eq.s32.totalorder %s16, 0
      %p78 = por %p76, %p77
      %s79 = ssub.s32 %s17, %s29
      %s80 = ssub.s32 %s18, %s25
      %s81 = sor.u32 %s79, %s80
      %p82 = scmp.eq.s32.totalorder %s81, 0
      %s84 = sadd.s32 %s83, 1
      %s85 = scalar_select %p82, %s83, %s84
      %p88 = pneg %p82
      %p89 = scmp.eq.s32.totalorder %s10, 3
      %p90 = por %p88, %p89
      %p91 = scmp.ne.s32.totalorder %s83, %s86
      %p92 = scmp.eq.s32.totalorder %s10, 0
      %p93 = por %p91, %p92
      %p94 = scmp.ne.s32.totalorder %s83, %s86
      %p95 = scmp.eq.s32.totalorder %s15, 3
      %p96 = por %p94, %p95
      %p97 = scmp.ne.s32.totalorder %s86, %s87
      %p98 = scmp.eq.s32.totalorder %s15, 0
      %p99 = por %p97, %p98
      %p100 = scmp.ne.s32.totalorder %s86, %s87
      %p101 = scmp.eq.s32.totalorder %s16, 3
      %p102 = por %p100, %p101
      %p104 = scmp.ne.s32.totalorder %s87, %s103
      %p105 = scmp.eq.s32.totalorder %s16, 0
      %p106 = por %p104, %p105
      %s107 = ssub.s32 %s17, %s29
      %s108 = ssub.s32 %s18, %s25
      %s109 = sor.u32 %s107, %s108
      %p110 = scmp.eq.s32.totalorder %s109, 0
      %s112 = sadd.s32 %s111, 1
      %s113 = scalar_select %p110, %s111, %s112
      %p116 = pneg %p110
      %p117 = scmp.eq.s32.totalorder %s10, 3
      %p118 = por %p116, %p117
      %p119 = scmp.ne.s32.totalorder %s111, %s114
      %p120 = scmp.eq.s32.totalorder %s10, 0
      %p121 = por %p119, %p120
      %p122 = scmp.ne.s32.totalorder %s111, %s114
      %p123 = scmp.eq.s32.totalorder %s15, 3
      %p124 = por %p122, %p123
      %p125 = scmp.ne.s32.totalorder %s114, %s115
      %p126 = scmp.eq.s32.totalorder %s15, 0
      %p127 = por %p125, %p126
      %p128 = scmp.ne.s32.totalorder %s114, %s115
      %p129 = scmp.eq.s32.totalorder %s16, 3
      %p130 = por %p128, %p129
      %p132 = scmp.ne.s32.totalorder %s115, %s131
      %p133 = scmp.eq.s32.totalorder %s16, 0
      %p134 = por %p132, %p133
      %p135 = scmp.le.s32.totalorder 1, %s10
      %p136 = scmp.lt.s32.totalorder %s10, 5
      %p137 = pnand %p135, %p136
      %p138 = pneg %p137
      // Predicated region
      $region9: #{conv2d_batchnorm_relu.2} parent=5 // pred_check
        _
      $region10: #{conv2d_batchnorm_relu.2} parent=5 // pred_check_branch
        %140 = sbr.rel (%p137) target = $region12
      $region11: #{conv2d_batchnorm_relu.2} parent=5 // pred_region
        %s141 = ssub.s32 %s10, 1
        // Predicated region
        $region13: #{conv2d_batchnorm_relu.2} parent=11 // pred_check
          %p142 = pneg %p71
        $region14: #{conv2d_batchnorm_relu.2} parent=11 // pred_check_branch
          %144 = sbr.rel (%p142) target = $region16
        $region15: #{conv2d_batchnorm_relu.2} parent=11 // pred_region
          _
        $region16: #{conv2d_batchnorm_relu.2} parent=11 // pred_fallthru
          _
      $region12: #{conv2d_batchnorm_relu.2} parent=5 // pred_fallthru
        _
      %p145 = scmp.lt.s32.totalorder %s10, 4
      // Predicated region
      $region17: #{conv2d_batchnorm_relu.2} parent=5 // pred_check
        %p146 = pneg %p145
      $region18: #{conv2d_batchnorm_relu.2} parent=5 // pred_check_branch
        %148 = sbr.rel (%p146) target = $region20
      $region19: #{conv2d_batchnorm_relu.2} parent=5 // pred_region
        // Predicated region
        $region21: #{conv2d_batchnorm_relu.2} parent=19 // pred_check
          %p149 = pneg %p44
        $region22: #{conv2d_batchnorm_relu.2} parent=19 // pred_check_branch
          %151 = sbr.rel (%p149) target = $region24
        $region23: #{conv2d_batchnorm_relu.2} parent=19 // pred_region
          %s152 = sand.u32 %s34, 1
          %s153 = sand.u32 %s34, 1
          %s154 = smul.addr %s153, 20
          %s155 = scalar_lea.vmem [#allocation2], %s154
          %s156 = smul.addr %s17, 10
          %s157 = sadd.s32 %s18, %s156
          %s158 = smul.addr %s157, 4
          %s159 = scalar_lea.vmem %s0, %s158
          // Predicated region
          $region25: #{conv2d_batchnorm_relu.2} parent=23 // pred_check
            _
          $region26: #{conv2d_batchnorm_relu.2} parent=23 // pred_check_branch
            %161 = sbr.rel (0) target = $region28
          $region27: #{conv2d_batchnorm_relu.2} parent=23 // pred_region
            // Predicated region
            $region29: #{conv2d_batchnorm_relu.2} parent=27 // pred_check
              _
            $region30: #{conv2d_batchnorm_relu.2} parent=27 // pred_check_branch
              %163 = sbr.rel target = $region32
            $region31: #{conv2d_batchnorm_relu.2} parent=27 // pred_region
              // Predicated region
              $region44: #{conv2d_batchnorm_relu.2} parent=31 // pred_check
                _
              $region45: #{conv2d_batchnorm_relu.2} parent=31 // pred_check_branch
                %186 = sbr.rel (0) target = $region47
              $region46: #{conv2d_batchnorm_relu.2} parent=31 // pred_region
                loop: start=0, step=1, limit=1
                $region48: #{conv2d_batchnorm_relu.2} parent=46 // loop_pre_header
                  _
                $region49: #{conv2d_batchnorm_relu.2} parent=46 // loop_header
                  %s188 = sphi 0, %s192
                  %p189 = scmp.ge.s32.totalorder %s188, 1
                  %s193 = sphi %s159, %s159
                  %s194 = sphi %s155, %s155
                $region50: #{conv2d_batchnorm_relu.2} parent=46 // loop_header_branch
                  %191 = sbr.rel (%p189) target = $region54
                $region51: #{conv2d_batchnorm_relu.2} parent=46 // loop_body
                  _
                $region52: #{conv2d_batchnorm_relu.2} parent=46 // loop_footer
                  %s192 = sadd.s32 1, %s188
                $region53: #{conv2d_batchnorm_relu.2} parent=46 // loop_footer_branch
                  %187 = sbr.rel target = $region49
                $region54: #{conv2d_batchnorm_relu.2} parent=46 // loop_exit
                  _
                loop: start=0, step=1, limit=1
                $region55: #{conv2d_batchnorm_relu.2} parent=46 // loop_pre_header
                  _
                $region56: #{conv2d_batchnorm_relu.2} parent=46 // loop_header
                  %s197 = sphi 0, %s201
                  %p198 = scmp.ge.s32.totalorder %s197, 1
                  %s202 = sphi %s159, %s159
                  %s203 = sphi %s155, %s155
                $region57: #{conv2d_batchnorm_relu.2} parent=46 // loop_header_branch
                  %200 = sbr.rel (%p198) target = $region61
                $region58: #{conv2d_batchnorm_relu.2} parent=46 // loop_body
                  %v204 = vld [vmem:[%s202] sm:$0xf]
                  %205 = vst [vmem:[%s203] sm:$0xf] %v204
                  %v206 = vld [vmem:[%s202 + $0x8] sm:$0xf]
                  %207 = vst [vmem:[%s203 + $0x4] sm:$0xf] %v206
                  %v208 = vld [vmem:[%s202 + $0x10] sm:$0xf]
                  %209 = vst [vmem:[%s203 + $0x8] sm:$0xf] %v208
                  %v210 = vld [vmem:[%s202 + $0x18] sm:$0xf]
                  %211 = vst [vmem:[%s203 + $0xc] sm:$0xf] %v210
                  %v212 = vld [vmem:[%s202 + $0x20] sm:$0xf]
                  %213 = vst [vmem:[%s203 + $0x10] sm:$0xf] %v212
                $region59: #{conv2d_batchnorm_relu.2} parent=46 // loop_footer
                  %s201 = sadd.s32 1, %s197
                $region60: #{conv2d_batchnorm_relu.2} parent=46 // loop_footer_branch
                  %196 = sbr.rel target = $region56
                $region61: #{conv2d_batchnorm_relu.2} parent=46 // loop_exit
                  _
              $region47: #{conv2d_batchnorm_relu.2} parent=31 // pred_fallthru
                _
            $region32: #{conv2d_batchnorm_relu.2} parent=27 // pred_fallthru
              _
            // Predicated region
            $region33: #{conv2d_batchnorm_relu.2} parent=27 // pred_check
              _
            $region34: #{conv2d_batchnorm_relu.2} parent=27 // pred_check_branch
              %165 = sbr.rel (0) target = $region36
            $region35: #{conv2d_batchnorm_relu.2} parent=27 // pred_region
              loop: start=0, step=1, limit=1
              $region37: #{conv2d_batchnorm_relu.2} parent=35 // loop_pre_header
                _
              $region38: #{conv2d_batchnorm_relu.2} parent=35 // loop_header
                %s168 = sphi 0, %s172
                %p169 = scmp.ge.s32.totalorder %s168, 1
                %s173 = sphi %s159, %s159
                %s174 = sphi %s155, %s155
              $region39: #{conv2d_batchnorm_relu.2} parent=35 // loop_header_branch
                %171 = sbr.rel (%p169) target = $region43
              $region40: #{conv2d_batchnorm_relu.2} parent=35 // loop_body
                %v175 = vld [vmem:[%s173] sm:$0xf]
                %176 = vst [vmem:[%s174] sm:$0xf] %v175
                %v177 = vld [vmem:[%s173 + $0x8] sm:$0xf]
                %178 = vst [vmem:[%s174 + $0x4] sm:$0xf] %v177
                %v179 = vld [vmem:[%s173 + $0x10] sm:$0xf]
                %180 = vst [vmem:[%s174 + $0x8] sm:$0xf] %v179
                %v181 = vld [vmem:[%s173 + $0x18] sm:$0xf]
                %182 = vst [vmem:[%s174 + $0xc] sm:$0xf] %v181
                %v183 = vld [vmem:[%s173 + $0x20] sm:$0xf]
                %184 = vst [vmem:[%s174 + $0x10] sm:$0xf] %v183
              $region41: #{conv2d_batchnorm_relu.2} parent=35 // loop_footer
                %s172 = sadd.s32 1, %s168
              $region42: #{conv2d_batchnorm_relu.2} parent=35 // loop_footer_branch
                %167 = sbr.rel target = $region38
              $region43: #{conv2d_batchnorm_relu.2} parent=35 // loop_exit
                _
            $region36: #{conv2d_batchnorm_relu.2} parent=27 // pred_fallthru
              _
          $region28: #{conv2d_batchnorm_relu.2} parent=23 // pred_fallthru
            _
          %214 = vnop
        $region24: #{conv2d_batchnorm_relu.2} parent=19 // pred_fallthru
          _
      $region20: #{conv2d_batchnorm_relu.2} parent=5 // pred_fallthru
        _
      %p215 = scmp.le.s32.totalorder 1, %s10
      %p216 = scmp.lt.s32.totalorder %s10, 5
      %p217 = pnand %p215, %p216
      %p218 = pneg %p217
      // Predicated region
      $region62: #{conv2d_batchnorm_relu.2} parent=5 // pred_check
        _
      $region63: #{conv2d_batchnorm_relu.2} parent=5 // pred_check_branch
        %220 = sbr.rel (%p217) target = $region65
      $region64: #{conv2d_batchnorm_relu.2} parent=5 // pred_region
        %s221 = ssub.s32 %s10, 1
        %s222 = sand.u32 %s37, 1
        %s223 = sand.u32 %s37, 1
        %s224 = smul.addr %s223, 20
        %s225 = scalar_lea.vmem [#allocation2], %s224
        // Predicated region
        $region66: #{conv2d_batchnorm_relu.2} parent=64 // pred_check
          %p226 = pneg %p50
        $region67: #{conv2d_batchnorm_relu.2} parent=64 // pred_check_branch
          %228 = sbr.rel (%p226) target = $region69
        $region68: #{conv2d_batchnorm_relu.2} parent=64 // pred_region
          _
        $region69: #{conv2d_batchnorm_relu.2} parent=64 // pred_fallthru
          _
        %s229 = sand.u32 %s37, 1
        %s230 = sand.u32 %s37, 1
        %s231 = smul.addr %s230, 20
        %s232 = scalar_lea.vmem [#allocation2], %s231
        %p233 = pneg %p50
        %p234 = pneg %p47
        %p235 = pneg %p71
        %p236 = pneg %p68
        %p237 = pneg %p99
        %p238 = pneg %p96
        %p239 = scmp.lt.s32.totalorder %s19, 1
        %s240 = scalar_select %p239, %s19, 1
        %p241 = scmp.lt.s32.totalorder %s20, 1
        %s242 = scalar_select %p241, %s20, 1
        %s243 = smul.addr %s242, 16
        %s244 = smul.addr %s240, 32
        %s245 = sadd.s32 %s243, %s244
        %s246 = smul.addr %s245, 8
        %s247 = scalar_lea.vmem %s2, %s246
        %p248 = pneg %p127
        %p249 = pneg %p124
        %p250 = scmp.lt.s32.totalorder %s19, 1
        %s251 = scalar_select %p250, %s19, 1
        %p252 = scmp.lt.s32.totalorder %s20, 1
        %s253 = scalar_select %p252, %s20, 1
        %s254 = smul.addr %s253, 16
        %s255 = smul.addr %s251, 32
        %s256 = sadd.s32 %s254, %s255
        %s257 = smul.addr %s256, 8
        %s258 = scalar_lea.vmem %s3, %s257
        %p259 = scmp.lt.s32.totalorder %s19, 1
        %s260 = scalar_select %p259, %s19, 1
        %p261 = scmp.lt.s32.totalorder %s20, 1
        %s262 = scalar_select %p261, %s20, 1
        %s263 = smul.addr %s262, 16
        %s264 = smul.addr %s260, 32
        %s265 = sadd.s32 %s263, %s264
        %s266 = smul.addr %s265, 8
        %s267 = scalar_lea.vmem %s2, %s266
        %p268 = scmp.lt.s32.totalorder %s19, 1
        %s269 = scalar_select %p268, %s19, 1
        %p270 = scmp.lt.s32.totalorder %s20, 1
        %s271 = scalar_select %p270, %s20, 1
        %s272 = smul.addr %s271, 16
        %s273 = smul.addr %s269, 32
        %s274 = sadd.s32 %s272, %s273
        %s275 = smul.addr %s274, 8
        %s276 = scalar_lea.vmem %s3, %s275
        %v278 = vld [vmem:[%s1] sm:$0xf]
        %v279 = vld [vmem:[%s1 + $0x4] sm:$0xf]
        %v280 = vld [vmem:[%s1 + $0x8] sm:$0xf]
        %v281 = vld [vmem:[%s1 + $0xc] sm:$0xf]
        %v282 = vld [vmem:[%s1 + $0x10] sm:$0xf]
        %v283 = vld [vmem:[%s1 + $0x14] sm:$0xf]
        %v284 = vld [vmem:[%s1 + $0x18] sm:$0xf]
        %v285 = vld [vmem:[%s1 + $0x1c] sm:$0xf]
        %v286 = vld [vmem:[%s1 + $0x20] sm:$0xf]
        %v287 = vld [vmem:[%s1 + $0x24] sm:$0xf]
        %v288 = vld [vmem:[%s1 + $0x28] sm:$0xf]
        %v289 = vld [vmem:[%s1 + $0x2c] sm:$0xf]
        %v290 = vld [vmem:[%s1 + $0x30] sm:$0xf]
        %v291 = vld [vmem:[%s1 + $0x34] sm:$0xf]
        %v292 = vld [vmem:[%s1 + $0x38] sm:$0xf]
        %v293 = vld [vmem:[%s1 + $0x3c] sm:$0xf]
        %v294 = vld [vmem:[%s225] sm:$0xf]
        %v295 = vld [vmem:[%s225 + $0x4] sm:$0xf]
        %v296 = vld [vmem:[%s225 + $0x8] sm:$0xf]
        %v297 = vld [vmem:[%s225 + $0xc] sm:$0xf]
        %v298 = vld [vmem:[%s225 + $0x10] sm:$0x3]
        %v315 = vunpack.c.l.b16 %v278
        %v316 = vunpack.c.l.b16 %v279
        %v317 = vunpack.c.l.b16 %v280
        %v318 = vunpack.c.l.b16 %v281
        %v319 = vunpack.c.l.b16 %v282
        %v320 = vunpack.c.l.b16 %v283
        %v321 = vunpack.c.l.b16 %v284
        %v322 = vunpack.c.l.b16 %v285
        %v323 = vunpack.c.l.b16 %v286
        %v324 = vunpack.c.l.b16 %v287
        %v325 = vunpack.c.l.b16 %v288
        %v326 = vunpack.c.l.b16 %v289
        %v327 = vunpack.c.l.b16 %v290
        %v328 = vunpack.c.l.b16 %v291
        %v329 = vunpack.c.l.b16 %v292
        %v330 = vunpack.c.l.b16 %v293
        %v331 = vpack.c.b16 %v316, %v315
        %v332 = vpack.c.b16 %v318, %v317
        %v333 = vpack.c.b16 %v320, %v319
        %v334 = vpack.c.b16 %v322, %v321
        %v335 = vpack.c.b16 %v324, %v323
        %v336 = vpack.c.b16 %v326, %v325
        %v337 = vpack.c.b16 %v328, %v327
        %v338 = vpack.c.b16 %v330, %v329
        %v344 = vunpack.c.l.b16 %v294
        %v345 = vunpack.c.l.b16 %v295
        %v346 = vunpack.c.l.b16 %v296
        %v347 = vunpack.c.l.b16 %v297
        %v348 = vunpack.c.l.b16 %v298
        %v349 = vpack.c.b16 %v345, %v344
        %v350 = vpack.c.b16 %v347, %v346
        %v351 = vpack.c.b16 %v348, %v348
        %vm354 = vcmask 293888
        %v356 = vsel %vm354, %v331, 0
        %v359 = vsel %vm354, %v332, 0
        %v362 = vsel %vm354, %v333, 0
        %v365 = vsel %vm354, %v334, 0
        %v368 = vsel %vm354, %v335, 0
        %v371 = vsel %vm354, %v336, 0
        %v374 = vsel %vm354, %v337, 0
        %v377 = vsel %vm354, %v338, 0
        %vm379 = vcmask 1041408
        %v381 = vsel %vm379, %v351, 0
        %383 = vmatprep.subr.bf16.mxu0 0
        %384 = vmatpush1.bf16.msra.mxu0 %v349
        %385 = vmatprep.subr.bf16.mxu0 0
        %386 = vmatpush1.bf16.msra.mxu0 %v350
        %387 = vmatprep.subr.bf16.mxu0 0
        %388 = vmatpush1.bf16.msra.mxu0 %v381
        %389 = vmatprep.subr.bf16.mxu0 0
        %390 = vmatpush1.bf16.msra.mxu0 0
        %391 = vmatprep.subr.bf16.mxu0 0
        %392 = vmatpush1.bf16.msra.mxu0 0
        %393 = vmatprep.subr.bf16.mxu0 0
        %394 = vmatpush1.bf16.msra.mxu0 0
        %395 = vmatprep.subr.bf16.mxu0 0
        %396 = vmatpush1.bf16.msra.mxu0 0
        %397 = vmatprep.subr.bf16.mxu0 0
        %398 = vmatpush1.bf16.msra.mxu0 0
        %399 = vmatprep.subr.bf16.mxu0 0
        %400 = vmatpush1.bf16.msra.mxu0 0
        %401 = vmatprep.subr.bf16.mxu0 0
        %402 = vmatpush1.bf16.msra.mxu0 0
        %403 = vmatprep.subr.bf16.mxu0 0
        %404 = vmatpush1.bf16.msra.mxu0 0
        %405 = vmatprep.subr.bf16.mxu0 0
        %406 = vmatpush1.bf16.msra.mxu0 0
        %407 = vmatprep.subr.bf16.mxu0 0
        %408 = vmatpush1.bf16.msra.mxu0 0
        %409 = vmatprep.subr.bf16.mxu0 0
        %410 = vmatpush1.bf16.msra.mxu0 0
        %411 = vmatprep.subr.bf16.mxu0 0
        %412 = vmatpush1.bf16.msra.mxu0 0
        %413 = vmatprep.subr.bf16.mxu0 0
        %414 = vmatpush1.bf16.msra.mxu0 0
        %415 = vmatprep.mubr.bf16.mxu0 0
        %416 = vmatmul.mubr.bf16.gmra.mrb[0].mxu0 %v356
        %v417 = vpop.f32.mrb[0].mxu0
        %v418 = vadd.f32 0.0, %v417
        %v419 = vpop.f32.mrb[0].mxu0
        %v420 = vpop.f32.mrb[0].mxu0
        %v421 = vadd.f32 0.0, %v420
        %v422 = vpop.f32.mrb[0].mxu0
        %423 = vmatprep.mubr.bf16.mxu0 0
        %424 = vmatmul.mubr.bf16.gmra.mrb[0].mxu0 %v359
        %v425 = vpop.f32.mrb[0].mxu0
        %v426 = vadd.f32 0.0, %v425
        %v427 = vpop.f32.mrb[0].mxu0
        %v428 = vpop.f32.mrb[0].mxu0
        %v429 = vadd.f32 0.0, %v428
        %v430 = vpop.f32.mrb[0].mxu0
        %431 = vmatprep.mubr.bf16.mxu0 0
        %432 = vmatmul.mubr.bf16.gmra.mrb[0].mxu0 %v362
        %v433 = vpop.f32.mrb[0].mxu0
        %v434 = vadd.f32 0.0, %v433
        %v435 = vpop.f32.mrb[0].mxu0
        %v436 = vpop.f32.mrb[0].mxu0
        %v437 = vadd.f32 0.0, %v436
        %v438 = vpop.f32.mrb[0].mxu0
        %439 = vmatprep.mubr.bf16.mxu0 0
        %440 = vmatmul.mubr.bf16.gmra.mrb[0].mxu0 %v365
        %v441 = vpop.f32.mrb[0].mxu0
        %v442 = vadd.f32 0.0, %v441
        %v443 = vpop.f32.mrb[0].mxu0
        %v444 = vpop.f32.mrb[0].mxu0
        %v445 = vadd.f32 0.0, %v444
        %v446 = vpop.f32.mrb[0].mxu0
        %447 = vmatprep.mubr.bf16.mxu0 0
        %448 = vmatmul.mubr.bf16.gmra.mrb[0].mxu0 %v368
        %v449 = vpop.f32.mrb[0].mxu0
        %v450 = vadd.f32 0.0, %v449
        %v451 = vpop.f32.mrb[0].mxu0
        %v452 = vpop.f32.mrb[0].mxu0
        %v453 = vadd.f32 0.0, %v452
        %v454 = vpop.f32.mrb[0].mxu0
        %455 = vmatprep.mubr.bf16.mxu0 0
        %456 = vmatmul.mubr.bf16.gmra.mrb[0].mxu0 %v371
        %v457 = vpop.f32.mrb[0].mxu0
        %v458 = vadd.f32 0.0, %v457
        %v459 = vpop.f32.mrb[0].mxu0
        %v460 = vpop.f32.mrb[0].mxu0
        %v461 = vadd.f32 0.0, %v460
        %v462 = vpop.f32.mrb[0].mxu0
        %463 = vmatprep.mubr.bf16.mxu0 0
        %464 = vmatmul.mubr.bf16.gmra.mrb[0].mxu0 %v374
        %v465 = vpop.f32.mrb[0].mxu0
        %v466 = vadd.f32 0.0, %v465
        %v467 = vpop.f32.mrb[0].mxu0
        %v468 = vpop.f32.mrb[0].mxu0
        %v469 = vadd.f32 0.0, %v468
        %v470 = vpop.f32.mrb[0].mxu0
        %471 = vmatprep.mubr.bf16.mxu0 0
        %472 = vmatmul.mubr.bf16.gmra.mrb[0].mxu0 %v377
        %v473 = vpop.f32.mrb[0].mxu0
        %v474 = vadd.f32 0.0, %v473
        %v475 = vpop.f32.mrb[0].mxu0
        %v476 = vpop.f32.mrb[0].mxu0
        %v477 = vadd.f32 0.0, %v476
        %v478 = vpop.f32.mrb[0].mxu0
        %479 = vdwg.mxu0
        %480 = vadd.xlane.f32.xlu0 %v418
        %v481 = vpop.xlane.xlu0 %480
        %482 = vadd.xlane.f32.xlu0 %v421
        %v483 = vpop.xlane.xlu0 %482
        %484 = vadd.xlane.f32.xlu0 %v426
        %v485 = vpop.xlane.xlu0 %484
        %486 = vadd.xlane.f32.xlu0 %v429
        %v487 = vpop.xlane.xlu0 %486
        %488 = vadd.xlane.f32.xlu0 %v434
        %v489 = vpop.xlane.xlu0 %488
        %490 = vadd.xlane.f32.xlu0 %v437
        %v491 = vpop.xlane.xlu0 %490
        %492 = vadd.xlane.f32.xlu0 %v442
        %v493 = vpop.xlane.xlu0 %492
        %494 = vadd.xlane.f32.xlu0 %v445
        %v495 = vpop.xlane.xlu0 %494
        %496 = vadd.xlane.f32.xlu0 %v450
        %v497 = vpop.xlane.xlu0 %496
        %498 = vadd.xlane.f32.xlu0 %v453
        %v499 = vpop.xlane.xlu0 %498
        %500 = vadd.xlane.f32.xlu0 %v458
        %v501 = vpop.xlane.xlu0 %500
        %502 = vadd.xlane.f32.xlu0 %v461
        %v503 = vpop.xlane.xlu0 %502
        %504 = vadd.xlane.f32.xlu0 %v466
        %v505 = vpop.xlane.xlu0 %504
        %506 = vadd.xlane.f32.xlu0 %v469
        %v507 = vpop.xlane.xlu0 %506
        %508 = vadd.xlane.f32.xlu0 %v474
        %v509 = vpop.xlane.xlu0 %508
        %510 = vadd.xlane.f32.xlu0 %v477
        %v511 = vpop.xlane.xlu0 %510
        %vm512 = vcmask 7168
        %513 = vst.msk [vmem:[%s267] sm:$0xff] %vm512, %v481
        %514 = vst.msk [vmem:[%s267 + $0x8] sm:$0xff] %vm512, %v483
        %515 = vst.msk [vmem:[%s267 + $0x10] sm:$0xff] %vm512, %v485
        %516 = vst.msk [vmem:[%s267 + $0x18] sm:$0xff] %vm512, %v487
        %517 = vst.msk [vmem:[%s267 + $0x20] sm:$0xff] %vm512, %v489
        %518 = vst.msk [vmem:[%s267 + $0x28] sm:$0xff] %vm512, %v491
        %519 = vst.msk [vmem:[%s267 + $0x30] sm:$0xff] %vm512, %v493
        %520 = vst.msk [vmem:[%s267 + $0x38] sm:$0xff] %vm512, %v495
        %521 = vst.msk [vmem:[%s267 + $0x40] sm:$0xff] %vm512, %v497
        %522 = vst.msk [vmem:[%s267 + $0x48] sm:$0xff] %vm512, %v499
        %523 = vst.msk [vmem:[%s267 + $0x50] sm:$0xff] %vm512, %v501
        %524 = vst.msk [vmem:[%s267 + $0x58] sm:$0xff] %vm512, %v503
        %525 = vst.msk [vmem:[%s267 + $0x60] sm:$0xff] %vm512, %v505
        %526 = vst.msk [vmem:[%s267 + $0x68] sm:$0xff] %vm512, %v507
        %527 = vst.msk [vmem:[%s267 + $0x70] sm:$0xff] %vm512, %v509
        %528 = vst.msk [vmem:[%s267 + $0x78] sm:$0xff] %vm512, %v511
        %v529 = vmul.f32 %v418, %v418
        %v530 = vmul.f32 %v421, %v421
        %v531 = vmul.f32 %v426, %v426
        %v532 = vmul.f32 %v429, %v429
        %v533 = vmul.f32 %v434, %v434
        %v534 = vmul.f32 %v437, %v437
        %v535 = vmul.f32 %v442, %v442
        %v536 = vmul.f32 %v445, %v445
        %v537 = vmul.f32 %v450, %v450
        %v538 = vmul.f32 %v453, %v453
        %v539 = vmul.f32 %v458, %v458
        %v540 = vmul.f32 %v461, %v461
        %v541 = vmul.f32 %v466, %v466
        %v542 = vmul.f32 %v469, %v469
        %v543 = vmul.f32 %v474, %v474
        %v544 = vmul.f32 %v477, %v477
        %545 = vadd.xlane.f32.xlu0 %v529
        %v546 = vpop.xlane.xlu0 %545
        %547 = vadd.xlane.f32.xlu0 %v530
        %v548 = vpop.xlane.xlu0 %547
        %549 = vadd.xlane.f32.xlu0 %v531
        %v550 = vpop.xlane.xlu0 %549
        %551 = vadd.xlane.f32.xlu0 %v532
        %v552 = vpop.xlane.xlu0 %551
        %553 = vadd.xlane.f32.xlu0 %v533
        %v554 = vpop.xlane.xlu0 %553
        %555 = vadd.xlane.f32.xlu0 %v534
        %v556 = vpop.xlane.xlu0 %555
        %557 = vadd.xlane.f32.xlu0 %v535
        %v558 = vpop.xlane.xlu0 %557
        %559 = vadd.xlane.f32.xlu0 %v536
        %v560 = vpop.xlane.xlu0 %559
        %561 = vadd.xlane.f32.xlu0 %v537
        %v562 = vpop.xlane.xlu0 %561
        %563 = vadd.xlane.f32.xlu0 %v538
        %v564 = vpop.xlane.xlu0 %563
        %565 = vadd.xlane.f32.xlu0 %v539
        %v566 = vpop.xlane.xlu0 %565
        %567 = vadd.xlane.f32.xlu0 %v540
        %v568 = vpop.xlane.xlu0 %567
        %569 = vadd.xlane.f32.xlu0 %v541
        %v570 = vpop.xlane.xlu0 %569
        %571 = vadd.xlane.f32.xlu0 %v542
        %v572 = vpop.xlane.xlu0 %571
        %573 = vadd.xlane.f32.xlu0 %v543
        %v574 = vpop.xlane.xlu0 %573
        %575 = vadd.xlane.f32.xlu0 %v544
        %v576 = vpop.xlane.xlu0 %575
        %577 = vst.msk [vmem:[%s276] sm:$0xff] %vm512, %v546
        %578 = vst.msk [vmem:[%s276 + $0x8] sm:$0xff] %vm512, %v548
        %579 = vst.msk [vmem:[%s276 + $0x10] sm:$0xff] %vm512, %v550
        %580 = vst.msk [vmem:[%s276 + $0x18] sm:$0xff] %vm512, %v552
        %581 = vst.msk [vmem:[%s276 + $0x20] sm:$0xff] %vm512, %v554
        %582 = vst.msk [vmem:[%s276 + $0x28] sm:$0xff] %vm512, %v556
        %583 = vst.msk [vmem:[%s276 + $0x30] sm:$0xff] %vm512, %v558
        %584 = vst.msk [vmem:[%s276 + $0x38] sm:$0xff] %vm512, %v560
        %585 = vst.msk [vmem:[%s276 + $0x40] sm:$0xff] %vm512, %v562
        %586 = vst.msk [vmem:[%s276 + $0x48] sm:$0xff] %vm512, %v564
        %587 = vst.msk [vmem:[%s276 + $0x50] sm:$0xff] %vm512, %v566
        %588 = vst.msk [vmem:[%s276 + $0x58] sm:$0xff] %vm512, %v568
        %589 = vst.msk [vmem:[%s276 + $0x60] sm:$0xff] %vm512, %v570
        %590 = vst.msk [vmem:[%s276 + $0x68] sm:$0xff] %vm512, %v572
        %591 = vst.msk [vmem:[%s276 + $0x70] sm:$0xff] %vm512, %v574
        %592 = vst.msk [vmem:[%s276 + $0x78] sm:$0xff] %vm512, %v576
        %p593 = scmp.lt.s32.totalorder %s19, 1
        %s594 = scalar_select %p593, %s19, 1
        %p595 = scmp.lt.s32.totalorder %s20, 1
        %s596 = scalar_select %p595, %s20, 1
        %s597 = smul.addr %s596, 16
        %s598 = smul.addr %s594, 32
        %s599 = sadd.s32 %s597, %s598
        %s600 = smul.addr %s599, 8
        %s601 = scalar_lea.vmem %s2, %s600
        %p602 = scmp.lt.s32.totalorder %s19, 1
        %s603 = scalar_select %p602, %s19, 1
        %p604 = scmp.lt.s32.totalorder %s20, 1
        %s605 = scalar_select %p604, %s20, 1
        %s606 = smul.addr %s605, 16
        %s607 = smul.addr %s603, 32
        %s608 = sadd.s32 %s606, %s607
        %s609 = smul.addr %s608, 8
        %s610 = scalar_lea.vmem %s3, %s609
        // Predicated region
        $region70: #{conv2d_batchnorm_relu.2} parent=64 // pred_check
          %p611 = pneg %p96
        $region71: #{conv2d_batchnorm_relu.2} parent=64 // pred_check_branch
          %613 = sbr.rel (%p611) target = $region73
        $region72: #{conv2d_batchnorm_relu.2} parent=64 // pred_region
          _
        $region73: #{conv2d_batchnorm_relu.2} parent=64 // pred_fallthru
          _
        // Predicated region
        $region74: #{conv2d_batchnorm_relu.2} parent=64 // pred_check
          %p614 = pneg %p124
        $region75: #{conv2d_batchnorm_relu.2} parent=64 // pred_check_branch
          %616 = sbr.rel (%p614) target = $region77
        $region76: #{conv2d_batchnorm_relu.2} parent=64 // pred_region
          _
        $region77: #{conv2d_batchnorm_relu.2} parent=64 // pred_fallthru
          _
      $region65: #{conv2d_batchnorm_relu.2} parent=5 // pred_fallthru
        _
      %p617 = scmp.le.s32.totalorder 2, %s10
      // Predicated region
      $region78: #{conv2d_batchnorm_relu.2} parent=5 // pred_check
        %p618 = pneg %p617
      $region79: #{conv2d_batchnorm_relu.2} parent=5 // pred_check_branch
        %620 = sbr.rel (%p618) target = $region81
      $region80: #{conv2d_batchnorm_relu.2} parent=5 // pred_region
        %s621 = ssub.s32 %s10, 2
        // Predicated region
        $region82: #{conv2d_batchnorm_relu.2} parent=80 // pred_check
          %p622 = pneg %p102
        $region83: #{conv2d_batchnorm_relu.2} parent=80 // pred_check_branch
          %624 = sbr.rel (%p622) target = $region85
        $region84: #{conv2d_batchnorm_relu.2} parent=80 // pred_region
          %p625 = scmp.lt.s32.totalorder %s21, 1
          %s626 = scalar_select %p625, %s21, 1
          %p627 = scmp.lt.s32.totalorder %s22, 1
          %s628 = scalar_select %p627, %s22, 1
          %s629 = smul.addr %s628, 16
          %s630 = smul.addr %s626, 32
          %s631 = sadd.s32 %s629, %s630
          %s632 = smul.addr %s631, 8
          %s633 = scalar_lea.vmem %s2, %s632
        $region85: #{conv2d_batchnorm_relu.2} parent=80 // pred_fallthru
          _
        // Predicated region
        $region86: #{conv2d_batchnorm_relu.2} parent=80 // pred_check
          %p634 = pneg %p130
        $region87: #{conv2d_batchnorm_relu.2} parent=80 // pred_check_branch
          %636 = sbr.rel (%p634) target = $region89
        $region88: #{conv2d_batchnorm_relu.2} parent=80 // pred_region
          %p637 = scmp.lt.s32.totalorder %s21, 1
          %s638 = scalar_select %p637, %s21, 1
          %p639 = scmp.lt.s32.totalorder %s22, 1
          %s640 = scalar_select %p639, %s22, 1
          %s641 = smul.addr %s640, 16
          %s642 = smul.addr %s638, 32
          %s643 = sadd.s32 %s641, %s642
          %s644 = smul.addr %s643, 8
          %s645 = scalar_lea.vmem %s3, %s644
        $region89: #{conv2d_batchnorm_relu.2} parent=80 // pred_fallthru
          _
      $region81: #{conv2d_batchnorm_relu.2} parent=5 // pred_fallthru
        _
    $region6: #{conv2d_batchnorm_relu.2} parent=1 // loop_footer
      %s14 = sadd.s32 1, %s10
    $region7: #{conv2d_batchnorm_relu.2} parent=1 // loop_footer_branch
      %9 = sbr.rel target = $region3
    $region8: #{conv2d_batchnorm_relu.2} parent=1 // loop_exit
      _

// kernel: conv2d_batchnorm_relu.3
$region0: #{conv2d_batchnorm_relu.3}
  #allocation0 [shape = 'u32[]', space=smem, size = 0x4, offset = 0x4, fixed_abs, tag = 'smem constant byte address 0x4 - core index']
  #allocation1 [shape = 'u32[144,128]{1,0:T(1,128)}', space=vmem, size = 0x12000, scoped, tag = 'internal scratch']
  %s0 = inlined_call_operand.vmem [shape: bf16[2,36,256], index: 0, kind: input, shape index: {}]
  %s1 = inlined_call_operand.vmem [shape: bf16[128,36], index: 1, kind: input, shape index: {}]
  %s2 = inlined_call_operand.vmem [shape: f32[128,1], index: 2, kind: input, shape index: {}]
  %s3 = inlined_call_operand.vmem [shape: f32[128,1], index: 3, kind: input, shape index: {}]
  %s4 = inlined_call_operand.vmem [shape: f32[2,8,256], index: 4, kind: output, shape index: {}]
  %s5 = sld [smem:[#allocation0]]
  $region90: #{conv2d_batchnorm_relu.3} parent=0
    _
  %s7 = ssub.s32 1, %s5
  %s8 = scalar_select 0, %s7, %s5
  $region1: #{conv2d_batchnorm_relu.3} parent=0
    #allocation2 [shape = 'u8[20480]{0}', space=vmem, size = 0x5000, scoped, tag = 'input window, operand 0']
    loop: start=0, step=1, limit=6
    $region2: #{conv2d_batchnorm_relu.3} parent=1 // loop_pre_header
      _
    $region3: #{conv2d_batchnorm_relu.3} parent=1 // loop_header
      %s10 = sphi 0, %s14
      %p11 = scmp.ge.s32.totalorder %s10, 6
      %s17 = sphi 0, %s29
      %s18 = sphi 0, %s25
      %s19 = sphi 0, %s17
      %s20 = sphi 0, %s18
      %s21 = sphi 0, %s19
      %s22 = sphi 0, %s20
      %s34 = sphi 0, %s36
      %s37 = sphi 0, %s34
      %s38 = sphi 0, %s37
      %s54 = sphi 0, %s38
      %s58 = sphi 0, %s58
      %s60 = sphi 0, %s58
      %s61 = sphi 0, %s60
      %s75 = sphi 0, %s61
      %s79 = sphi 0, %s79
      %s81 = sphi 0, %s79
      %s82 = sphi 0, %s81
      %s96 = sphi 0, %s82
      %s100 = sphi 0, %s100
      %s102 = sphi 0, %s100
      %s103 = sphi 0, %s102
      %s117 = sphi 0, %s103
      %s125 = sphi 0, %s127
      %s128 = sphi 0, %s125
      %s129 = sphi 0, %s128
      %s145 = sphi 0, %s129
    $region4: #{conv2d_batchnorm_relu.3} parent=1 // loop_header_branch
      %13 = sbr.rel (%p11) target = $region8
    $region5: #{conv2d_batchnorm_relu.3} parent=1 // loop_body
      %s15 = ssub.s32 %s10, 1
      %s16 = ssub.s32 %s10, 2
      %s23 = sadd.s32 1, %s18
      %p24 = scmp.ge.s32.totalorder %s23, 2
      %s25 = scalar_select %p24, 0, %s23
      %s26 = sadd.s32 1, %s17
      %s27 = scalar_select %p24, %s26, %s17
      %p28 = scmp.ge.s32.totalorder %s27, 2
      %s29 = scalar_select %p28, 0, %s27
      %s30 = ssub.s32 %s17, %s29
      %s31 = ssub.s32 %s18, %s25
      %s32 = sor.u32 %s30, %s31
      %p33 = scmp.eq.s32.totalorder %s32, 0
      %s35 = sadd.s32 %s34, 1
      %s36 = scalar_select %p33, %s34, %s35
      %p39 = pneg %p33
      %p40 = scmp.eq.s32.totalorder %s10, 3
      %p41 = por %p39, %p40
      %p42 = scmp.ne.s32.totalorder %s34, %s37
      %p43 = scmp.eq.s32.totalorder %s10, 0
      %p44 = por %p42, %p43
      %p45 = scmp.ne.s32.totalorder %s34, %s37
      %p46 = scmp.eq.s32.totalorder %s15, 3
      %p47 = por %p45, %p46
      %p48 = scmp.ne.s32.totalorder %s37, %s38
      %p49 = scmp.eq.s32.totalorder %s15, 0
      %p50 = por %p48, %p49
      %p51 = scmp.ne.s32.totalorder %s37, %s38
      %p52 = scmp.eq.s32.totalorder %s16, 3
      %p53 = por %p51, %p52
      %p55 = scmp.ne.s32.totalorder %s38, %s54
      %p56 = scmp.eq.s32.totalorder %s16, 0
      %p57 = por %p55, %p56
      %s59 = sadd.s32 %s58, 1
      %p62 = scmp.eq.s32.totalorder %s10, 3
      %p63 = scmp.ne.s32.totalorder %s58, %s60
      %p64 = scmp.eq.s32.totalorder %s10, 0
      %p65 = por %p63, %p64
      %p66 = scmp.ne.s32.totalorder %s58, %s60
      %p67 = scmp.eq.s32.totalorder %s15, 3
      %p68 = por %p66, %p67
      %p69 = scmp.ne.s32.totalorder %s60, %s61
      %p70 = scmp.eq.s32.totalorder %s15, 0
      %p71 = por %p69, %p70
      %p72 = scmp.ne.s32.totalorder %s60, %s61
      %p73 = scmp.eq.s32.totalorder %s16, 3
      %p74 = por %p72, %p73
      %p76 = scmp.ne.s32.totalorder %s61, %s75
      %p77 = scmp.eq.s32.totalorder %s16, 0
      %p78 = por %p76, %p77
      %s80 = sadd.s32 %s79, 1
      %p83 = scmp.eq.s32.totalorder %s10, 3
      %p84 = scmp.ne.s32.totalorder %s79, %s81
      %p85 = scmp.eq.s32.totalorder %s10, 0
      %p86 = por %p84, %p85
      %p87 = scmp.ne.s32.totalorder %s79, %s81
      %p88 = scmp.eq.s32.totalorder %s15, 3
      %p89 = por %p87, %p88
      %p90 = scmp.ne.s32.totalorder %s81, %s82
      %p91 = scmp.eq.s32.totalorder %s15, 0
      %p92 = por %p90, %p91
      %p93 = scmp.ne.s32.totalorder %s81, %s82
      %p94 = scmp.eq.s32.totalorder %s16, 3
      %p95 = por %p93, %p94
      %p97 = scmp.ne.s32.totalorder %s82, %s96
      %p98 = scmp.eq.s32.totalorder %s16, 0
      %p99 = por %p97, %p98
      %s101 = sadd.s32 %s100, 1
      %p104 = scmp.eq.s32.totalorder %s10, 3
      %p105 = scmp.ne.s32.totalorder %s100, %s102
      %p106 = scmp.eq.s32.totalorder %s10, 0
      %p107 = por %p105, %p106
      %p108 = scmp.ne.s32.totalorder %s100, %s102
      %p109 = scmp.eq.s32.totalorder %s15, 3
      %p110 = por %p108, %p109
      %p111 = scmp.ne.s32.totalorder %s102, %s103
      %p112 = scmp.eq.s32.totalorder %s15, 0
      %p113 = por %p111, %p112
      %p114 = scmp.ne.s32.totalorder %s102, %s103
      %p115 = scmp.eq.s32.totalorder %s16, 3
      %p116 = por %p114, %p115
      %p118 = scmp.ne.s32.totalorder %s103, %s117
      %p119 = scmp.eq.s32.totalorder %s16, 0
      %p120 = por %p118, %p119
      %s121 = ssub.s32 %s17, %s29
      %s122 = ssub.s32 %s18, %s25
      %s123 = sor.u32 %s121, %s122
      %p124 = scmp.eq.s32.totalorder %s123, 0
      %s126 = sadd.s32 %s125, 1
      %s127 = scalar_select %p124, %s125, %s126
      %p130 = pneg %p124
      %p131 = scmp.eq.s32.totalorder %s10, 3
      %p132 = por %p130, %p131
      %p133 = scmp.ne.s32.totalorder %s125, %s128
      %p134 = scmp.eq.s32.totalorder %s10, 0
      %p135 = por %p133, %p134
      %p136 = scmp.ne.s32.totalorder %s125, %s128
      %p137 = scmp.eq.s32.totalorder %s15, 3
      %p138 = por %p136, %p137
      %p139 = scmp.ne.s32.totalorder %s128, %s129
      %p140 = scmp.eq.s32.totalorder %s15, 0
      %p141 = por %p139, %p140
      %p142 = scmp.ne.s32.totalorder %s128, %s129
      %p143 = scmp.eq.s32.totalorder %s16, 3
      %p144 = por %p142, %p143
      %p146 = scmp.ne.s32.totalorder %s129, %s145
      %p147 = scmp.eq.s32.totalorder %s16, 0
      %p148 = por %p146, %p147
      %p149 = scmp.le.s32.totalorder 1, %s10
      %p150 = scmp.lt.s32.totalorder %s10, 5
      %p151 = pnand %p149, %p150
      %p152 = pneg %p151
      // Predicated region
      $region9: #{conv2d_batchnorm_relu.3} parent=5 // pred_check
        _
      $region10: #{conv2d_batchnorm_relu.3} parent=5 // pred_check_branch
        %154 = sbr.rel (%p151) target = $region12
      $region11: #{conv2d_batchnorm_relu.3} parent=5 // pred_region
        %s155 = ssub.s32 %s10, 1
        // Predicated region
        $region13: #{conv2d_batchnorm_relu.3} parent=11 // pred_check
          %p156 = pneg %p71
        $region14: #{conv2d_batchnorm_relu.3} parent=11 // pred_check_branch
          %158 = sbr.rel (%p156) target = $region16
        $region15: #{conv2d_batchnorm_relu.3} parent=11 // pred_region
          _
        $region16: #{conv2d_batchnorm_relu.3} parent=11 // pred_fallthru
          _
        // Predicated region
        $region17: #{conv2d_batchnorm_relu.3} parent=11 // pred_check
          %p159 = pneg %p92
        $region18: #{conv2d_batchnorm_relu.3} parent=11 // pred_check_branch
          %161 = sbr.rel (%p159) target = $region20
        $region19: #{conv2d_batchnorm_relu.3} parent=11 // pred_region
          _
        $region20: #{conv2d_batchnorm_relu.3} parent=11 // pred_fallthru
          _
        // Predicated region
        $region21: #{conv2d_batchnorm_relu.3} parent=11 // pred_check
          %p162 = pneg %p113
        $region22: #{conv2d_batchnorm_relu.3} parent=11 // pred_check_branch
          %164 = sbr.rel (%p162) target = $region24
        $region23: #{conv2d_batchnorm_relu.3} parent=11 // pred_region
          _
        $region24: #{conv2d_batchnorm_relu.3} parent=11 // pred_fallthru
          _
      $region12: #{conv2d_batchnorm_relu.3} parent=5 // pred_fallthru
        _
      %p165 = scmp.lt.s32.totalorder %s10, 4
      // Predicated region
      $region25: #{conv2d_batchnorm_relu.3} parent=5 // pred_check
        %p166 = pneg %p165
      $region26: #{conv2d_batchnorm_relu.3} parent=5 // pred_check_branch
        %168 = sbr.rel (%p166) target = $region28
      $region27: #{conv2d_batchnorm_relu.3} parent=5 // pred_region
        // Predicated region
        $region29: #{conv2d_batchnorm_relu.3} parent=27 // pred_check
          %p169 = pneg %p44
        $region30: #{conv2d_batchnorm_relu.3} parent=27 // pred_check_branch
          %171 = sbr.rel (%p169) target = $region32
        $region31: #{conv2d_batchnorm_relu.3} parent=27 // pred_region
          %s172 = sand.u32 %s34, 1
          %s173 = sand.u32 %s34, 1
          %s174 = smul.addr %s173, 20
          %s175 = scalar_lea.vmem [#allocation2], %s174
          %s176 = smul.addr %s17, 10
          %s177 = sadd.s32 %s18, %s176
          %s178 = smul.addr %s177, 4
          %s179 = scalar_lea.vmem %s0, %s178
          // Predicated region
          $region33: #{conv2d_batchnorm_relu.3} parent=31 // pred_check
            _
          $region34: #{conv2d_batchnorm_relu.3} parent=31 // pred_check_branch
            %181 = sbr.rel (0) target = $region36
          $region35: #{conv2d_batchnorm_relu.3} parent=31 // pred_region
            // Predicated region
            $region37: #{conv2d_batchnorm_relu.3} parent=35 // pred_check
              _
            $region38: #{conv2d_batchnorm_relu.3} parent=35 // pred_check_branch
              %183 = sbr.rel target = $region40
            $region39: #{conv2d_batchnorm_relu.3} parent=35 // pred_region
              // Predicated region
              $region52: #{conv2d_batchnorm_relu.3} parent=39 // pred_check
                _
              $region53: #{conv2d_batchnorm_relu.3} parent=39 // pred_check_branch
                %206 = sbr.rel (0) target = $region55
              $region54: #{conv2d_batchnorm_relu.3} parent=39 // pred_region
                loop: start=0, step=1, limit=1
                $region56: #{conv2d_batchnorm_relu.3} parent=54 // loop_pre_header
                  _
                $region57: #{conv2d_batchnorm_relu.3} parent=54 // loop_header
                  %s208 = sphi 0, %s212
                  %p209 = scmp.ge.s32.totalorder %s208, 1
                  %s213 = sphi %s179, %s179
                  %s214 = sphi %s175, %s175
                $region58: #{conv2d_batchnorm_relu.3} parent=54 // loop_header_branch
                  %211 = sbr.rel (%p209) target = $region62
                $region59: #{conv2d_batchnorm_relu.3} parent=54 // loop_body
                  _
                $region60: #{conv2d_batchnorm_relu.3} parent=54 // loop_footer
                  %s212 = sadd.s32 1, %s208
                $region61: #{conv2d_batchnorm_relu.3} parent=54 // loop_footer_branch
                  %207 = sbr.rel target = $region57
                $region62: #{conv2d_batchnorm_relu.3} parent=54 // loop_exit
                  _
                loop: start=0, step=1, limit=1
                $region63: #{conv2d_batchnorm_relu.3} parent=54 // loop_pre_header
                  _
                $region64: #{conv2d_batchnorm_relu.3} parent=54 // loop_header
                  %s217 = sphi 0, %s221
                  %p218 = scmp.ge.s32.totalorder %s217, 1
                  %s222 = sphi %s179, %s179
                  %s223 = sphi %s175, %s175
                $region65: #{conv2d_batchnorm_relu.3} parent=54 // loop_header_branch
                  %220 = sbr.rel (%p218) target = $region69
                $region66: #{conv2d_batchnorm_relu.3} parent=54 // loop_body
                  %v224 = vld [vmem:[%s222] sm:$0xf]
                  %225 = vst [vmem:[%s223] sm:$0xf] %v224
                  %v226 = vld [vmem:[%s222 + $0x8] sm:$0xf]
                  %227 = vst [vmem:[%s223 + $0x4] sm:$0xf] %v226
                  %v228 = vld [vmem:[%s222 + $0x10] sm:$0xf]
                  %229 = vst [vmem:[%s223 + $0x8] sm:$0xf] %v228
                  %v230 = vld [vmem:[%s222 + $0x18] sm:$0xf]
                  %231 = vst [vmem:[%s223 + $0xc] sm:$0xf] %v230
                  %v232 = vld [vmem:[%s222 + $0x20] sm:$0xf]
                  %233 = vst [vmem:[%s223 + $0x10] sm:$0xf] %v232
                $region67: #{conv2d_batchnorm_relu.3} parent=54 // loop_footer
                  %s221 = sadd.s32 1, %s217
                $region68: #{conv2d_batchnorm_relu.3} parent=54 // loop_footer_branch
                  %216 = sbr.rel target = $region64
                $region69: #{conv2d_batchnorm_relu.3} parent=54 // loop_exit
                  _
              $region55: #{conv2d_batchnorm_relu.3} parent=39 // pred_fallthru
                _
            $region40: #{conv2d_batchnorm_relu.3} parent=35 // pred_fallthru
              _
            // Predicated region
            $region41: #{conv2d_batchnorm_relu.3} parent=35 // pred_check
              _
            $region42: #{conv2d_batchnorm_relu.3} parent=35 // pred_check_branch
              %185 = sbr.rel (0) target = $region44
            $region43: #{conv2d_batchnorm_relu.3} parent=35 // pred_region
              loop: start=0, step=1, limit=1
              $region45: #{conv2d_batchnorm_relu.3} parent=43 // loop_pre_header
                _
              $region46: #{conv2d_batchnorm_relu.3} parent=43 // loop_header
                %s188 = sphi 0, %s192
                %p189 = scmp.ge.s32.totalorder %s188, 1
                %s193 = sphi %s179, %s179
                %s194 = sphi %s175, %s175
              $region47: #{conv2d_batchnorm_relu.3} parent=43 // loop_header_branch
                %191 = sbr.rel (%p189) target = $region51
              $region48: #{conv2d_batchnorm_relu.3} parent=43 // loop_body
                %v195 = vld [vmem:[%s193] sm:$0xf]
                %196 = vst [vmem:[%s194] sm:$0xf] %v195
                %v197 = vld [vmem:[%s193 + $0x8] sm:$0xf]
                %198 = vst [vmem:[%s194 + $0x4] sm:$0xf] %v197
                %v199 = vld [vmem:[%s193 + $0x10] sm:$0xf]
                %200 = vst [vmem:[%s194 + $0x8] sm:$0xf] %v199
                %v201 = vld [vmem:[%s193 + $0x18] sm:$0xf]
                %202 = vst [vmem:[%s194 + $0xc] sm:$0xf] %v201
                %v203 = vld [vmem:[%s193 + $0x20] sm:$0xf]
                %204 = vst [vmem:[%s194 + $0x10] sm:$0xf] %v203
              $region49: #{conv2d_batchnorm_relu.3} parent=43 // loop_footer
                %s192 = sadd.s32 1, %s188
              $region50: #{conv2d_batchnorm_relu.3} parent=43 // loop_footer_branch
                %187 = sbr.rel target = $region46
              $region51: #{conv2d_batchnorm_relu.3} parent=43 // loop_exit
                _
            $region44: #{conv2d_batchnorm_relu.3} parent=35 // pred_fallthru
              _
          $region36: #{conv2d_batchnorm_relu.3} parent=31 // pred_fallthru
            _
          %234 = vnop
        $region32: #{conv2d_batchnorm_relu.3} parent=27 // pred_fallthru
          _
      $region28: #{conv2d_batchnorm_relu.3} parent=5 // pred_fallthru
        _
      %p235 = scmp.le.s32.totalorder 1, %s10
      %p236 = scmp.lt.s32.totalorder %s10, 5
      %p237 = pnand %p235, %p236
      %p238 = pneg %p237
      // Predicated region
      $region70: #{conv2d_batchnorm_relu.3} parent=5 // pred_check
        _
      $region71: #{conv2d_batchnorm_relu.3} parent=5 // pred_check_branch
        %240 = sbr.rel (%p237) target = $region73
      $region72: #{conv2d_batchnorm_relu.3} parent=5 // pred_region
        %s241 = ssub.s32 %s10, 1
        %s242 = sand.u32 %s37, 1
        %s243 = sand.u32 %s37, 1
        %s244 = smul.addr %s243, 20
        %s245 = scalar_lea.vmem [#allocation2], %s244
        // Predicated region
        $region74: #{conv2d_batchnorm_relu.3} parent=72 // pred_check
          %p246 = pneg %p50
        $region75: #{conv2d_batchnorm_relu.3} parent=72 // pred_check_branch
          %248 = sbr.rel (%p246) target = $region77
        $region76: #{conv2d_batchnorm_relu.3} parent=72 // pred_region
          _
        $region77: #{conv2d_batchnorm_relu.3} parent=72 // pred_fallthru
          _
        %s249 = sand.u32 %s37, 1
        %s250 = sand.u32 %s37, 1
        %s251 = smul.addr %s250, 20
        %s252 = scalar_lea.vmem [#allocation2], %s251
        %p253 = pneg %p50
        %p254 = pneg %p47
        %p255 = pneg %p71
        %p256 = pneg %p68
        %p257 = pneg %p92
        %p258 = pneg %p89
        %p259 = pneg %p113
        %p260 = pneg %p110
        %p261 = pneg %p141
        %p262 = pneg %p138
        %p263 = scmp.lt.s32.totalorder %s19, 1
        %s264 = scalar_select %p263, %s19, 1
        %p265 = scmp.lt.s32.totalorder %s20, 1
        %s266 = scalar_select %p265, %s20, 1
        %s267 = smul.addr %s264, 2
        %s268 = sadd.s32 %s266, %s267
        %s269 = smul.addr %s268, 8
        %s270 = scalar_lea.vmem %s4, %s269
        %p271 = scmp.lt.s32.totalorder %s19, 1
        %s272 = scalar_select %p271, %s19, 1
        %p273 = scmp.lt.s32.totalorder %s20, 1
        %s274 = scalar_select %p273, %s20, 1
        %s275 = smul.addr %s272, 2
        %s276 = sadd.s32 %s274, %s275
        %s277 = smul.addr %s276, 8
        %s278 = scalar_lea.vmem %s4, %s277
        %v280 = vld [vmem:[%s1] sm:$0xf]
        %v281 = vld [vmem:[%s1 + $0x4] sm:$0xf]
        %v282 = vld [vmem:[%s1 + $0x8] sm:$0xf]
        %v283 = vld [vmem:[%s1 + $0xc] sm:$0xf]
        %v284 = vld [vmem:[%s1 + $0x10] sm:$0xf]
        %v285 = vld [vmem:[%s1 + $0x14] sm:$0xf]
        %v286 = vld [vmem:[%s1 + $0x18] sm:$0xf]
        %v287 = vld [vmem:[%s1 + $0x1c] sm:$0xf]
        %v288 = vld [vmem:[%s1 + $0x20] sm:$0xf]
        %v289 = vld [vmem:[%s1 + $0x24] sm:$0xf]
        %v290 = vld [vmem:[%s1 + $0x28] sm:$0xf]
        %v291 = vld [vmem:[%s1 + $0x2c] sm:$0xf]
        %v292 = vld [vmem:[%s1 + $0x30] sm:$0xf]
        %v293 = vld [vmem:[%s1 + $0x34] sm:$0xf]
        %v294 = vld [vmem:[%s1 + $0x38] sm:$0xf]
        %v295 = vld [vmem:[%s1 + $0x3c] sm:$0xf]
        %v296 = vld [vmem:[%s245] sm:$0xf]
        %v297 = vld [vmem:[%s245 + $0x4] sm:$0xf]
        %v298 = vld [vmem:[%s245 + $0x8] sm:$0xf]
        %v299 = vld [vmem:[%s245 + $0xc] sm:$0xf]
        %v300 = vld [vmem:[%s245 + $0x10] sm:$0x3]
        %v317 = vunpack.c.l.b16 %v280
        %v318 = vunpack.c.l.b16 %v281
        %v319 = vunpack.c.l.b16 %v282
        %v320 = vunpack.c.l.b16 %v283
        %v321 = vunpack.c.l.b16 %v284
        %v322 = vunpack.c.l.b16 %v285
        %v323 = vunpack.c.l.b16 %v286
        %v324 = vunpack.c.l.b16 %v287
        %v325 = vunpack.c.l.b16 %v288
        %v326 = vunpack.c.l.b16 %v289
        %v327 = vunpack.c.l.b16 %v290
        %v328 = vunpack.c.l.b16 %v291
        %v329 = vunpack.c.l.b16 %v292
        %v330 = vunpack.c.l.b16 %v293
        %v331 = vunpack.c.l.b16 %v294
        %v332 = vunpack.c.l.b16 %v295
        %v333 = vpack.c.b16 %v318, %v317
        %v334 = vpack.c.b16 %v320, %v319
        %v335 = vpack.c.b16 %v322, %v321
        %v336 = vpack.c.b16 %v324, %v323
        %v337 = vpack.c.b16 %v326, %v325
        %v338 = vpack.c.b16 %v328, %v327
        %v339 = vpack.c.b16 %v330, %v329
        %v340 = vpack.c.b16 %v332, %v331
        %v346 = vunpack.c.l.b16 %v296
        %v347 = vunpack.c.l.b16 %v297
        %v348 = vunpack.c.l.b16 %v298
        %v349 = vunpack.c.l.b16 %v299
        %v350 = vunpack.c.l.b16 %v300
        %v351 = vpack.c.b16 %v347, %v346
        %v352 = vpack.c.b16 %v349, %v348
        %v353 = vpack.c.b16 %v350, %v350
        %vm356 = vcmask 293888
        %v358 = vsel %vm356, %v333, 0
        %v361 = vsel %vm356, %v334, 0
        %v364 = vsel %vm356, %v335, 0
        %v367 = vsel %vm356, %v336, 0
        %v370 = vsel %vm356, %v337, 0
        %v373 = vsel %vm356, %v338, 0
        %v376 = vsel %vm356, %v339, 0
        %v379 = vsel %vm356, %v340, 0
        %vm381 = vcmask 1041408
        %v383 = vsel %vm381, %v353, 0
        %385 = vmatprep.subr.bf16.mxu0 0
        %386 = vmatpush1.bf16.msra.mxu0 %v351
        %387 = vmatprep.subr.bf16.mxu0 0
        %388 = vmatpush1.bf16.msra.mxu0 %v352
        %389 = vmatprep.subr.bf16.mxu0 0
        %390 = vmatpush1.bf16.msra.mxu0 %v383
        %391 = vmatprep.subr.bf16.mxu0 0
        %392 = vmatpush1.bf16.msra.mxu0 0
        %393 = vmatprep.subr.bf16.mxu0 0
        %394 = vmatpush1.bf16.msra.mxu0 0
        %395 = vmatprep.subr.bf16.mxu0 0
        %396 = vmatpush1.bf16.msra.mxu0 0
        %397 = vmatprep.subr.bf16.mxu0 0
        %398 = vmatpush1.bf16.msra.mxu0 0
        %399 = vmatprep.subr.bf16.mxu0 0
        %400 = vmatpush1.bf16.msra.mxu0 0
        %401 = vmatprep.subr.bf16.mxu0 0
        %402 = vmatpush1.bf16.msra.mxu0 0
        %403 = vmatprep.subr.bf16.mxu0 0
        %404 = vmatpush1.bf16.msra.mxu0 0
        %405 = vmatprep.subr.bf16.mxu0 0
        %406 = vmatpush1.bf16.msra.mxu0 0
        %407 = vmatprep.subr.bf16.mxu0 0
        %408 = vmatpush1.bf16.msra.mxu0 0
        %409 = vmatprep.subr.bf16.mxu0 0
        %410 = vmatpush1.bf16.msra.mxu0 0
        %411 = vmatprep.subr.bf16.mxu0 0
        %412 = vmatpush1.bf16.msra.mxu0 0
        %413 = vmatprep.subr.bf16.mxu0 0
        %414 = vmatpush1.bf16.msra.mxu0 0
        %415 = vmatprep.subr.bf16.mxu0 0
        %416 = vmatpush1.bf16.msra.mxu0 0
        %417 = vmatprep.mubr.bf16.mxu0 0
        %418 = vmatmul.mubr.bf16.gmra.mrb[0].mxu0 %v358
        %v419 = vpop.f32.mrb[0].mxu0
        %v420 = vadd.f32 0.0, %v419
        %v421 = vpop.f32.mrb[0].mxu0
        %v422 = vpop.f32.mrb[0].mxu0
        %v423 = vpop.f32.mrb[0].mxu0
        %424 = vmatprep.mubr.bf16.mxu0 0
        %425 = vmatmul.mubr.bf16.gmra.mrb[0].mxu0 %v361
        %v426 = vpop.f32.mrb[0].mxu0
        %v427 = vpop.f32.mrb[0].mxu0
        %v428 = vpop.f32.mrb[0].mxu0
        %v429 = vpop.f32.mrb[0].mxu0
        %430 = vmatprep.mubr.bf16.mxu0 0
        %431 = vmatmul.mubr.bf16.gmra.mrb[0].mxu0 %v364
        %v432 = vpop.f32.mrb[0].mxu0
        %v433 = vpop.f32.mrb[0].mxu0
        %v434 = vpop.f32.mrb[0].mxu0
        %v435 = vpop.f32.mrb[0].mxu0
        %436 = vmatprep.mubr.bf16.mxu0 0
        %437 = vmatmul.mubr.bf16.gmra.mrb[0].mxu0 %v367
        %v438 = vpop.f32.mrb[0].mxu0
        %v439 = vpop.f32.mrb[0].mxu0
        %v440 = vpop.f32.mrb[0].mxu0
        %v441 = vpop.f32.mrb[0].mxu0
        %442 = vmatprep.mubr.bf16.mxu0 0
        %443 = vmatmul.mubr.bf16.gmra.mrb[0].mxu0 %v370
        %v444 = vpop.f32.mrb[0].mxu0
        %v445 = vpop.f32.mrb[0].mxu0
        %v446 = vpop.f32.mrb[0].mxu0
        %v447 = vpop.f32.mrb[0].mxu0
        %448 = vmatprep.mubr.bf16.mxu0 0
        %449 = vmatmul.mubr.bf16.gmra.mrb[0].mxu0 %v373
        %v450 = vpop.f32.mrb[0].mxu0
        %v451 = vpop.f32.mrb[0].mxu0
        %v452 = vpop.f32.mrb[0].mxu0
        %v453 = vpop.f32.mrb[0].mxu0
        %454 = vmatprep.mubr.bf16.mxu0 0
        %455 = vmatmul.mubr.bf16.gmra.mrb[0].mxu0 %v376
        %v456 = vpop.f32.mrb[0].mxu0
        %v457 = vpop.f32.mrb[0].mxu0
        %v458 = vpop.f32.mrb[0].mxu0
        %v459 = vpop.f32.mrb[0].mxu0
        %460 = vmatprep.mubr.bf16.mxu0 0
        %461 = vmatmul.mubr.bf16.gmra.mrb[0].mxu0 %v379
        %v462 = vpop.f32.mrb[0].mxu0
        %v463 = vpop.f32.mrb[0].mxu0
        %v464 = vpop.f32.mrb[0].mxu0
        %v465 = vpop.f32.mrb[0].mxu0
        %466 = vdwg.mxu0
        %v467 = vld [vmem:[%s2] sm:$0xff]
        %469 = vset.pattern.permute.xlu0 0
        %470 = vperm.xlu0 %469, %v467
        %v471 = vpop.permute.xlu0 %470
        %v473 = vmul.f32 %v420, %v471
        %v474 = vld [vmem:[%s3] sm:$0xff]
        %476 = vset.pattern.permute.xlu0 0
        %477 = vperm.xlu0 %476, %v474
        %v478 = vpop.permute.xlu0 %477
        %v480 = vadd.f32 %v473, %v478
        %v481 = vmax.f32 %v480, 0.0
        %482 = vst [vmem:[%s278] sm:$0xff] %v481
        %p483 = scmp.lt.s32.totalorder %s19, 1
        %s484 = scalar_select %p483, %s19, 1
        %p485 = scmp.lt.s32.totalorder %s20, 1
        %s486 = scalar_select %p485, %s20, 1
        %s487 = smul.addr %s484, 2
        %s488 = sadd.s32 %s486, %s487
        %s489 = smul.addr %s488, 8
        %s490 = scalar_lea.vmem %s4, %s489
        // Predicated region
        $region78: #{conv2d_batchnorm_relu.3} parent=72 // pred_check
          %p491 = pneg %p138
        $region79: #{conv2d_batchnorm_relu.3} parent=72 // pred_check_branch
          %493 = sbr.rel (%p491) target = $region81
        $region80: #{conv2d_batchnorm_relu.3} parent=72 // pred_region
          _
        $region81: #{conv2d_batchnorm_relu.3} parent=72 // pred_fallthru
          _
      $region73: #{conv2d_batchnorm_relu.3} parent=5 // pred_fallthru
        _
      %p494 = scmp.le.s32.totalorder 2, %s10
      // Predicated region
      $region82: #{conv2d_batchnorm_relu.3} parent=5 // pred_check
        %p495 = pneg %p494
      $region83: #{conv2d_batchnorm_relu.3} parent=5 // pred_check_branch
        %497 = sbr.rel (%p495) target = $region85
      $region84: #{conv2d_batchnorm_relu.3} parent=5 // pred_region
        %s498 = ssub.s32 %s10, 2
        // Predicated region
        $region86: #{conv2d_batchnorm_relu.3} parent=84 // pred_check
          %p499 = pneg %p144
        $region87: #{conv2d_batchnorm_relu.3} parent=84 // pred_check_branch
          %501 = sbr.rel (%p499) target = $region89
        $region88: #{conv2d_batchnorm_relu.3} parent=84 // pred_region
          %p502 = scmp.lt.s32.totalorder %s21, 1
          %s503 = scalar_select %p502, %s21, 1
          %p504 = scmp.lt.s32.totalorder %s22, 1
          %s505 = scalar_select %p504, %s22, 1
          %s506 = smul.addr %s503, 2
          %s507 = sadd.s32 %s505, %s506
          %s508 = smul.addr %s507, 8
          %s509 = scalar_lea.vmem %s4, %s508
        $region89: #{conv2d_batchnorm_relu.3} parent=84 // pred_fallthru
          _
      $region85: #{conv2d_batchnorm_relu.3} parent=5 // pred_fallthru
        _
    $region6: #{conv2d_batchnorm_relu.3} parent=1 // loop_footer
      %s14 = sadd.s32 1, %s10
    $region7: #{conv2d_batchnorm_relu.3} parent=1 // loop_footer_branch
      %9 = sbr.rel target = $region3
    $region8: #{conv2d_batchnorm_relu.3} parent=1 // loop_exit
      _

</llo_original>
